<compile_context>
chip_gen: v7x
topology: tpu7x:2x2x1
jax: 0.10.0
libtpu: 0.0.40
codegen_flags: <defaults>
</compile_context>

<pallas_src>
import functools
import math

import jax
import jax.numpy as jnp
from jax.experimental import pallas as pl
from jax.experimental.pallas import tpu as pltpu


def _hd_loss_kernel(pred_ref, gt_ref, out_ref, *, img_w, weights):
    p = pred_ref[...].astype(jnp.float32)
    g = gt_ref[...].astype(jnp.float32)
    h, bw = p.shape  # bw = TB * img_w (lane-packed batch of images)

    # Broadcast-shaped boundary masks, hoisted out of the erosion loop.
    row = jax.lax.broadcasted_iota(jnp.int32, (h, 1), 0)
    col = jax.lax.broadcasted_iota(jnp.int32, (1, bw), 1) % img_w
    up_ok = (row != 0).astype(jnp.float32)             # (h, 1): row 0 has no "up"
    down_ok = (row != h - 1).astype(jnp.float32)       # (h, 1): last row no "down"
    left_ok = (col != 0).astype(jnp.float32)           # (1, bw): per-image left edge
    right_ok = (col != img_w - 1).astype(jnp.float32)  # (1, bw): per-image right edge

    bound = (p - g) ** 2
    acc = jnp.float32(0.0)

    # `weights` is a static tuple of Python floats -> fully unrolled loop with
    # constant-folded per-step weights; live set per step is just `bound`+acc.
    for wk in weights:
        # Zero-padded 3x3 cross conv == masked XLU rolls + VPU adds.
        up = pltpu.roll(bound, shift=1, axis=0) * up_ok
        down = pltpu.roll(bound, shift=h - 1, axis=0) * down_ok
        left = pltpu.roll(bound, shift=1, axis=1) * left_ok
        right = pltpu.roll(bound, shift=bw - 1, axis=1) * right_ok
        dilation = 0.2 * (bound + up + down + left + right)
        erosion = jnp.maximum(dilation - 0.5, 0.0)
        # Scalar accumulation instead of a full-tile accumulator (bit-exact
        # reordering of the weighted sum).
        acc = acc + jnp.float32(wk) * jnp.sum(erosion)
        bound = erosion

    out_ref[...] = jnp.broadcast_to(acc, out_ref.shape)


def _choose_tiling(b, h, w, max_block_elems, min_blocks=2):
    """Pick a batch tile TB (in images) such that the packed lane width TB*W
    is a multiple of 128 (lane-dense, unmasked vld/vst), each block fits the
    element budget, and — when there is enough work — the grid has at least
    `min_blocks` blocks (so both v7x TensorCores get a shard).  The batch is
    padded up to num_blocks*TB with zero images (which contribute 0)."""
    tb_unit = 128 // math.gcd(w, 128)            # smallest lane-dense batch tile
    units = -(-b // tb_unit)                     # ceil: total tile-units of work
    budget_units = max(1, max_block_elems // (tb_unit * h * w))
    target_blocks = min_blocks if units >= min_blocks else 1
    units_per_block = max(1, min(budget_units, -(-units // target_blocks)))
    tb = units_per_block * tb_unit
    num_blocks = -(-units // units_per_block)
    return tb, num_blocks, num_blocks * tb


def hd_loss(prediction, ground_truth, *, alpha=2.0, erosions=10,
            max_block_elems=512 * 1024):
    """Erosion-based Hausdorff loss. Inputs are NCHW; returns a scalar."""
    assert prediction.shape == ground_truth.shape
    n, c, h, w = prediction.shape
    b = n * c

    tb, num_blocks, b_pad = _choose_tiling(b, h, w, max_block_elems)
    lane_w = tb * w
    total = b * h * w  # true element count (padding contributes 0 to the sum)

    # Lane-dense packing: (N, C, H, W) -> (H, B_pad*W).  Inputs keep their
    # original dtype (DMA bytes stay small); the f32 cast is done in-kernel.
    def pack(x):
        x = x.reshape(b, h, w)
        if b_pad > b:
            x = jnp.pad(x, ((0, b_pad - b), (0, 0), (0, 0)))
        return jnp.transpose(x, (1, 0, 2)).reshape(h, b_pad * w)

    p_packed = pack(prediction)
    g_packed = pack(ground_truth)

    # Static erosion weights (k+1)^alpha as Python floats.
    weights = tuple(float((k + 1) ** alpha) for k in range(erosions))
    kernel = functools.partial(_hd_loss_kernel, img_w=w, weights=weights)

    bytes_in = 2 * b_pad * h * w * jnp.dtype(prediction.dtype).itemsize
    partials = pl.pallas_call(
        kernel,
        out_shape=jax.ShapeDtypeStruct((num_blocks, 8, 128), jnp.float32),
        grid=(num_blocks,),
        in_specs=[
            pl.BlockSpec((h, lane_w), lambda i: (0, i)),
            pl.BlockSpec((h, lane_w), lambda i: (0, i)),
        ],
        out_specs=pl.BlockSpec((1, 8, 128), lambda i: (i, 0, 0)),
        compiler_params=pltpu.CompilerParams(
            dimension_semantics=("parallel",),
            vmem_limit_bytes=48 * 1024 * 1024,  # safe on v7x (64 MiB physical)
        ),
        cost_estimate=pl.CostEstimate(
            flops=int(erosions * 15 * b_pad * h * w),
            transcendentals=0,
            bytes_accessed=int(bytes_in + num_blocks * 8 * 128 * 4),
        ),
    )(p_packed, g_packed)

    return jnp.sum(partials[:, 0, 0]) / float(total)


def hd_loss_ref(prediction, ground_truth, *, alpha=2.0, erosions=10):
    """Pure-JAX reference (explicit zero-padded 3x3 cross conv)."""
    p = prediction.astype(jnp.float32)
    g = ground_truth.astype(jnp.float32)
    h, w = p.shape[2], p.shape[3]
    bound = (p - g) ** 2
    eroded = jnp.zeros_like(bound)
    for k in range(erosions):
        fp = jnp.pad(bound, ((0, 0), (0, 0), (1, 1), (1, 1)))
        dilation = 0.2 * (
            fp[:, :, 1 : h + 1, 1 : w + 1]
            + fp[:, :, 0:h, 1 : w + 1]
            + fp[:, :, 2 : h + 2, 1 : w + 1]
            + fp[:, :, 1 : h + 1, 0:w]
            + fp[:, :, 1 : h + 1, 2 : w + 2]
        )
        erosion = jnp.maximum(dilation - 0.5, 0.0)
        eroded = eroded + erosion * float((k + 1) ** alpha)
        bound = erosion
    return jnp.mean(eroded)


if __name__ == "__main__":
    key = jax.random.PRNGKey(0)
    k1, k2, k3, k4 = jax.random.split(key, 4)

    # Primary shape (batch=2, channels=4, spatial=16): soft prediction in
    # (0, 1), binary ground truth.
    n, c, h, w = 2, 4, 16, 16
    prediction = jax.nn.sigmoid(2.0 * jax.random.normal(k1, (n, c, h, w), jnp.float32))
    ground_truth = jnp.round(jax.random.uniform(k2, (n, c, h, w), jnp.float32))

    loss = hd_loss(prediction, ground_truth)
    jax.block_until_ready(loss)
    loss_ref = hd_loss_ref(prediction, ground_truth)
    assert jnp.isfinite(loss), "kernel produced non-finite loss"
    assert jnp.allclose(loss, loss_ref, rtol=2e-5, atol=1e-6), (loss, loss_ref)

    # Second case with a small per-block budget to exercise the batch grid
    # (num_blocks > 1), zero-image padding and the partial-sum reduction path.
    n2, c2, h2, w2 = 4, 4, 32, 32
    pred2 = jax.nn.sigmoid(2.0 * jax.random.normal(k3, (n2, c2, h2, w2), jnp.float32))
    gt2 = jnp.round(jax.random.uniform(k4, (n2, c2, h2, w2), jnp.float32))
    loss2 = hd_loss(pred2, gt2, max_block_elems=4 * 32 * 32)
    jax.block_until_ready(loss2)
    loss2_ref = hd_loss_ref(pred2, gt2)
    assert jnp.isfinite(loss2), "kernel produced non-finite loss (tiled case)"
    assert jnp.allclose(loss2, loss2_ref, rtol=2e-5, atol=1e-6), (loss2, loss2_ref)

    # Third case: default budget on a larger batch -> >= 2 parallel blocks.
    loss3 = hd_loss(pred2, gt2)
    jax.block_until_ready(loss3)
    assert jnp.allclose(loss3, loss2_ref, rtol=2e-5, atol=1e-6), (loss3, loss2_ref)

    print("KERNEL_OK")
</pallas_src>

<mosaic_0001>
module attributes {stable_mosaic.version = 11 : i64} {
  func.func @_hd_loss_kernel(%arg0: i32, %arg1: memref<16x128xf32, #tpu.memory_space<vmem>>, %arg2: memref<16x128xf32, #tpu.memory_space<vmem>>, %arg3: memref<1x8x128xf32, #tpu.memory_space<vmem>>) attributes {dimension_semantics = [#tpu.dimension_semantics<parallel>], iteration_bounds = array<i64: 1>, scalar_prefetch = 0 : i64, scratch_operands = 0 : i64, tpu.core_type = #tpu.core_type<tc>, window_params = [{transform_indices = @transform_0, window_bounds = array<i64: 16, 128>}, {transform_indices = @transform_1, window_bounds = array<i64: 16, 128>}, {transform_indices = @transform_2, window_bounds = array<i64: 1, 8, 128>}]} {
    %c0 = arith.constant 0 : index
    %c0_0 = arith.constant 0 : index
    %0 = vector.load %arg1[%c0, %c0_0] : memref<16x128xf32, #tpu.memory_space<vmem>>, vector<16x128xf32>
    %c0_1 = arith.constant 0 : index
    %c0_2 = arith.constant 0 : index
    %1 = vector.load %arg2[%c0_1, %c0_2] : memref<16x128xf32, #tpu.memory_space<vmem>>, vector<16x128xf32>
    %2 = tpu.iota {dimensions = array<i32: 0>} : vector<16x1xi32>
    %3 = tpu.iota {dimensions = array<i32: 1>} : vector<1x128xi32>
    %c16_i32 = arith.constant 16 : i32
    %c0_i32 = arith.constant 0 : i32
    %4 = arith.cmpi eq, %c16_i32, %c0_i32 : i32
    %c1_i32 = arith.constant 1 : i32
    %5 = arith.select %4, %c1_i32, %c16_i32 : i32
    %6 = vector.broadcast %5 : i32 to vector<1x128xi32>
    %7 = arith.remsi %3, %6 : vector<1x128xi32>
    %c0_i32_3 = arith.constant 0 : i32
    %8 = vector.broadcast %c0_i32_3 : i32 to vector<1x128xi32>
    %9 = arith.cmpi ne, %7, %8 : vector<1x128xi32>
    %c0_i32_4 = arith.constant 0 : i32
    %10 = vector.broadcast %c0_i32_4 : i32 to vector<1x128xi32>
    %11 = arith.cmpi slt, %7, %10 : vector<1x128xi32>
    %c0_i32_5 = arith.constant 0 : i32
    %12 = arith.cmpi slt, %5, %c0_i32_5 : i32
    %13 = vector.broadcast %12 : i1 to vector<1x128xi1>
    %14 = vector.broadcast %13 : vector<1x128xi1> to vector<1x128xi1>
    %15 = arith.xori %11, %14 : vector<1x128xi1>
    %16 = arith.andi %15, %9 : vector<1x128xi1>
    %17 = vector.broadcast %5 : i32 to vector<1x128xi32>
    %18 = arith.addi %7, %17 : vector<1x128xi32>
    %19 = arith.select %16, %18, %7 : vector<1x128xi1>, vector<1x128xi32>
    %c0_i32_6 = arith.constant 0 : i32
    %20 = vector.broadcast %c0_i32_6 : i32 to vector<16x1xi32>
    %21 = arith.cmpi ne, %2, %20 : vector<16x1xi32>
    %22 = arith.extui %21 : vector<16x1xi1> to vector<16x1xi32>
    %23 = arith.sitofp %22 : vector<16x1xi32> to vector<16x1xf32>
    %c15_i32 = arith.constant 15 : i32
    %24 = vector.broadcast %c15_i32 : i32 to vector<16x1xi32>
    %25 = arith.cmpi ne, %2, %24 : vector<16x1xi32>
    %26 = arith.extui %25 : vector<16x1xi1> to vector<16x1xi32>
    %27 = arith.sitofp %26 : vector<16x1xi32> to vector<16x1xf32>
    %c0_i32_7 = arith.constant 0 : i32
    %28 = vector.broadcast %c0_i32_7 : i32 to vector<1x128xi32>
    %29 = arith.cmpi ne, %19, %28 : vector<1x128xi32>
    %30 = arith.extui %29 : vector<1x128xi1> to vector<1x128xi32>
    %31 = arith.sitofp %30 : vector<1x128xi32> to vector<1x128xf32>
    %c15_i32_8 = arith.constant 15 : i32
    %32 = vector.broadcast %c15_i32_8 : i32 to vector<1x128xi32>
    %33 = arith.cmpi ne, %19, %32 : vector<1x128xi32>
    %34 = arith.extui %33 : vector<1x128xi1> to vector<1x128xi32>
    %35 = arith.sitofp %34 : vector<1x128xi32> to vector<1x128xf32>
    %36 = arith.subf %0, %1 : vector<16x128xf32>
    %37 = arith.mulf %36, %36 : vector<16x128xf32>
    %c1_i32_9 = arith.constant 1 : i32
    %38 = tpu.dynamic_rotate %37 by %c1_i32_9 dim 0 : vector<16x128xf32>, i32 -> vector<16x128xf32>
    %39 = vector.broadcast %23 : vector<16x1xf32> to vector<16x128xf32>
    %40 = arith.mulf %38, %39 : vector<16x128xf32>
    %c15_i32_10 = arith.constant 15 : i32
    %41 = tpu.dynamic_rotate %37 by %c15_i32_10 dim 0 : vector<16x128xf32>, i32 -> vector<16x128xf32>
    %42 = vector.broadcast %27 : vector<16x1xf32> to vector<16x128xf32>
    %43 = arith.mulf %41, %42 : vector<16x128xf32>
    %c1_i32_11 = arith.constant 1 : i32
    %44 = tpu.dynamic_rotate %37 by %c1_i32_11 dim 1 : vector<16x128xf32>, i32 -> vector<16x128xf32>
    %45 = vector.broadcast %31 : vector<1x128xf32> to vector<16x128xf32>
    %46 = arith.mulf %44, %45 : vector<16x128xf32>
    %c127_i32 = arith.constant 127 : i32
    %47 = tpu.dynamic_rotate %37 by %c127_i32 dim 1 : vector<16x128xf32>, i32 -> vector<16x128xf32>
    %48 = vector.broadcast %35 : vector<1x128xf32> to vector<16x128xf32>
    %49 = arith.mulf %47, %48 : vector<16x128xf32>
    %50 = arith.addf %37, %40 : vector<16x128xf32>
    %51 = arith.addf %50, %43 : vector<16x128xf32>
    %52 = arith.addf %51, %46 : vector<16x128xf32>
    %53 = arith.addf %52, %49 : vector<16x128xf32>
    %cst = arith.constant 2.000000e-01 : f32
    %54 = vector.broadcast %cst : f32 to vector<16x128xf32>
    %55 = arith.mulf %54, %53 : vector<16x128xf32>
    %cst_12 = arith.constant 5.000000e-01 : f32
    %56 = vector.broadcast %cst_12 : f32 to vector<16x128xf32>
    %57 = arith.subf %55, %56 : vector<16x128xf32>
    %cst_13 = arith.constant 0.000000e+00 : f32
    %58 = vector.broadcast %cst_13 : f32 to vector<16x128xf32>
    %59 = arith.maximumf %57, %58 : vector<16x128xf32>
    %60 = vector.shape_cast %59 : vector<16x128xf32> to vector<1x16x128xf32>
    %cst_14 = arith.constant dense<0.000000e+00> : vector<1xf32>
    %61 = vector.multi_reduction <add>, %60, %cst_14 [1, 2] : vector<1x16x128xf32> to vector<1xf32>
    %62 = vector.shape_cast %61 : vector<1xf32> to vector<1x1x1xf32>
    %63 = vector.extract %62[0, 0, 0] : f32 from vector<1x1x1xf32>
    %cst_15 = arith.constant 1.000000e+00 : f32
    %64 = arith.mulf %cst_15, %63 : f32
    %cst_16 = arith.constant 0.000000e+00 : f32
    %65 = arith.addf %cst_16, %64 : f32
    %c1_i32_17 = arith.constant 1 : i32
    %66 = tpu.dynamic_rotate %59 by %c1_i32_17 dim 0 : vector<16x128xf32>, i32 -> vector<16x128xf32>
    %67 = vector.broadcast %23 : vector<16x1xf32> to vector<16x128xf32>
    %68 = arith.mulf %66, %67 : vector<16x128xf32>
    %c15_i32_18 = arith.constant 15 : i32
    %69 = tpu.dynamic_rotate %59 by %c15_i32_18 dim 0 : vector<16x128xf32>, i32 -> vector<16x128xf32>
    %70 = vector.broadcast %27 : vector<16x1xf32> to vector<16x128xf32>
    %71 = arith.mulf %69, %70 : vector<16x128xf32>
    %c1_i32_19 = arith.constant 1 : i32
    %72 = tpu.dynamic_rotate %59 by %c1_i32_19 dim 1 : vector<16x128xf32>, i32 -> vector<16x128xf32>
    %73 = vector.broadcast %31 : vector<1x128xf32> to vector<16x128xf32>
    %74 = arith.mulf %72, %73 : vector<16x128xf32>
    %c127_i32_20 = arith.constant 127 : i32
    %75 = tpu.dynamic_rotate %59 by %c127_i32_20 dim 1 : vector<16x128xf32>, i32 -> vector<16x128xf32>
    %76 = vector.broadcast %35 : vector<1x128xf32> to vector<16x128xf32>
    %77 = arith.mulf %75, %76 : vector<16x128xf32>
    %78 = arith.addf %59, %68 : vector<16x128xf32>
    %79 = arith.addf %78, %71 : vector<16x128xf32>
    %80 = arith.addf %79, %74 : vector<16x128xf32>
    %81 = arith.addf %80, %77 : vector<16x128xf32>
    %cst_21 = arith.constant 2.000000e-01 : f32
    %82 = vector.broadcast %cst_21 : f32 to vector<16x128xf32>
    %83 = arith.mulf %82, %81 : vector<16x128xf32>
    %cst_22 = arith.constant 5.000000e-01 : f32
    %84 = vector.broadcast %cst_22 : f32 to vector<16x128xf32>
    %85 = arith.subf %83, %84 : vector<16x128xf32>
    %cst_23 = arith.constant 0.000000e+00 : f32
    %86 = vector.broadcast %cst_23 : f32 to vector<16x128xf32>
    %87 = arith.maximumf %85, %86 : vector<16x128xf32>
    %88 = vector.shape_cast %87 : vector<16x128xf32> to vector<1x16x128xf32>
    %cst_24 = arith.constant dense<0.000000e+00> : vector<1xf32>
    %89 = vector.multi_reduction <add>, %88, %cst_24 [1, 2] : vector<1x16x128xf32> to vector<1xf32>
    %90 = vector.shape_cast %89 : vector<1xf32> to vector<1x1x1xf32>
    %91 = vector.extract %90[0, 0, 0] : f32 from vector<1x1x1xf32>
    %cst_25 = arith.constant 4.000000e+00 : f32
    %92 = arith.mulf %cst_25, %91 : f32
    %93 = arith.addf %65, %92 : f32
    %c1_i32_26 = arith.constant 1 : i32
    %94 = tpu.dynamic_rotate %87 by %c1_i32_26 dim 0 : vector<16x128xf32>, i32 -> vector<16x128xf32>
    %95 = vector.broadcast %23 : vector<16x1xf32> to vector<16x128xf32>
    %96 = arith.mulf %94, %95 : vector<16x128xf32>
    %c15_i32_27 = arith.constant 15 : i32
    %97 = tpu.dynamic_rotate %87 by %c15_i32_27 dim 0 : vector<16x128xf32>, i32 -> vector<16x128xf32>
    %98 = vector.broadcast %27 : vector<16x1xf32> to vector<16x128xf32>
    %99 = arith.mulf %97, %98 : vector<16x128xf32>
    %c1_i32_28 = arith.constant 1 : i32
    %100 = tpu.dynamic_rotate %87 by %c1_i32_28 dim 1 : vector<16x128xf32>, i32 -> vector<16x128xf32>
    %101 = vector.broadcast %31 : vector<1x128xf32> to vector<16x128xf32>
    %102 = arith.mulf %100, %101 : vector<16x128xf32>
    %c127_i32_29 = arith.constant 127 : i32
    %103 = tpu.dynamic_rotate %87 by %c127_i32_29 dim 1 : vector<16x128xf32>, i32 -> vector<16x128xf32>
    %104 = vector.broadcast %35 : vector<1x128xf32> to vector<16x128xf32>
    %105 = arith.mulf %103, %104 : vector<16x128xf32>
    %106 = arith.addf %87, %96 : vector<16x128xf32>
    %107 = arith.addf %106, %99 : vector<16x128xf32>
    %108 = arith.addf %107, %102 : vector<16x128xf32>
    %109 = arith.addf %108, %105 : vector<16x128xf32>
    %cst_30 = arith.constant 2.000000e-01 : f32
    %110 = vector.broadcast %cst_30 : f32 to vector<16x128xf32>
    %111 = arith.mulf %110, %109 : vector<16x128xf32>
    %cst_31 = arith.constant 5.000000e-01 : f32
    %112 = vector.broadcast %cst_31 : f32 to vector<16x128xf32>
    %113 = arith.subf %111, %112 : vector<16x128xf32>
    %cst_32 = arith.constant 0.000000e+00 : f32
    %114 = vector.broadcast %cst_32 : f32 to vector<16x128xf32>
    %115 = arith.maximumf %113, %114 : vector<16x128xf32>
    %116 = vector.shape_cast %115 : vector<16x128xf32> to vector<1x16x128xf32>
    %cst_33 = arith.constant dense<0.000000e+00> : vector<1xf32>
    %117 = vector.multi_reduction <add>, %116, %cst_33 [1, 2] : vector<1x16x128xf32> to vector<1xf32>
    %118 = vector.shape_cast %117 : vector<1xf32> to vector<1x1x1xf32>
    %119 = vector.extract %118[0, 0, 0] : f32 from vector<1x1x1xf32>
    %cst_34 = arith.constant 9.000000e+00 : f32
    %120 = arith.mulf %cst_34, %119 : f32
    %121 = arith.addf %93, %120 : f32
    %c1_i32_35 = arith.constant 1 : i32
    %122 = tpu.dynamic_rotate %115 by %c1_i32_35 dim 0 : vector<16x128xf32>, i32 -> vector<16x128xf32>
    %123 = vector.broadcast %23 : vector<16x1xf32> to vector<16x128xf32>
    %124 = arith.mulf %122, %123 : vector<16x128xf32>
    %c15_i32_36 = arith.constant 15 : i32
    %125 = tpu.dynamic_rotate %115 by %c15_i32_36 dim 0 : vector<16x128xf32>, i32 -> vector<16x128xf32>
    %126 = vector.broadcast %27 : vector<16x1xf32> to vector<16x128xf32>
    %127 = arith.mulf %125, %126 : vector<16x128xf32>
    %c1_i32_37 = arith.constant 1 : i32
    %128 = tpu.dynamic_rotate %115 by %c1_i32_37 dim 1 : vector<16x128xf32>, i32 -> vector<16x128xf32>
    %129 = vector.broadcast %31 : vector<1x128xf32> to vector<16x128xf32>
    %130 = arith.mulf %128, %129 : vector<16x128xf32>
    %c127_i32_38 = arith.constant 127 : i32
    %131 = tpu.dynamic_rotate %115 by %c127_i32_38 dim 1 : vector<16x128xf32>, i32 -> vector<16x128xf32>
    %132 = vector.broadcast %35 : vector<1x128xf32> to vector<16x128xf32>
    %133 = arith.mulf %131, %132 : vector<16x128xf32>
    %134 = arith.addf %115, %124 : vector<16x128xf32>
    %135 = arith.addf %134, %127 : vector<16x128xf32>
    %136 = arith.addf %135, %130 : vector<16x128xf32>
    %137 = arith.addf %136, %133 : vector<16x128xf32>
    %cst_39 = arith.constant 2.000000e-01 : f32
    %138 = vector.broadcast %cst_39 : f32 to vector<16x128xf32>
    %139 = arith.mulf %138, %137 : vector<16x128xf32>
    %cst_40 = arith.constant 5.000000e-01 : f32
    %140 = vector.broadcast %cst_40 : f32 to vector<16x128xf32>
    %141 = arith.subf %139, %140 : vector<16x128xf32>
    %cst_41 = arith.constant 0.000000e+00 : f32
    %142 = vector.broadcast %cst_41 : f32 to vector<16x128xf32>
    %143 = arith.maximumf %141, %142 : vector<16x128xf32>
    %144 = vector.shape_cast %143 : vector<16x128xf32> to vector<1x16x128xf32>
    %cst_42 = arith.constant dense<0.000000e+00> : vector<1xf32>
    %145 = vector.multi_reduction <add>, %144, %cst_42 [1, 2] : vector<1x16x128xf32> to vector<1xf32>
    %146 = vector.shape_cast %145 : vector<1xf32> to vector<1x1x1xf32>
    %147 = vector.extract %146[0, 0, 0] : f32 from vector<1x1x1xf32>
    %cst_43 = arith.constant 1.600000e+01 : f32
    %148 = arith.mulf %cst_43, %147 : f32
    %149 = arith.addf %121, %148 : f32
    %c1_i32_44 = arith.constant 1 : i32
    %150 = tpu.dynamic_rotate %143 by %c1_i32_44 dim 0 : vector<16x128xf32>, i32 -> vector<16x128xf32>
    %151 = vector.broadcast %23 : vector<16x1xf32> to vector<16x128xf32>
    %152 = arith.mulf %150, %151 : vector<16x128xf32>
    %c15_i32_45 = arith.constant 15 : i32
    %153 = tpu.dynamic_rotate %143 by %c15_i32_45 dim 0 : vector<16x128xf32>, i32 -> vector<16x128xf32>
    %154 = vector.broadcast %27 : vector<16x1xf32> to vector<16x128xf32>
    %155 = arith.mulf %153, %154 : vector<16x128xf32>
    %c1_i32_46 = arith.constant 1 : i32
    %156 = tpu.dynamic_rotate %143 by %c1_i32_46 dim 1 : vector<16x128xf32>, i32 -> vector<16x128xf32>
    %157 = vector.broadcast %31 : vector<1x128xf32> to vector<16x128xf32>
    %158 = arith.mulf %156, %157 : vector<16x128xf32>
    %c127_i32_47 = arith.constant 127 : i32
    %159 = tpu.dynamic_rotate %143 by %c127_i32_47 dim 1 : vector<16x128xf32>, i32 -> vector<16x128xf32>
    %160 = vector.broadcast %35 : vector<1x128xf32> to vector<16x128xf32>
    %161 = arith.mulf %159, %160 : vector<16x128xf32>
    %162 = arith.addf %143, %152 : vector<16x128xf32>
    %163 = arith.addf %162, %155 : vector<16x128xf32>
    %164 = arith.addf %163, %158 : vector<16x128xf32>
    %165 = arith.addf %164, %161 : vector<16x128xf32>
    %cst_48 = arith.constant 2.000000e-01 : f32
    %166 = vector.broadcast %cst_48 : f32 to vector<16x128xf32>
    %167 = arith.mulf %166, %165 : vector<16x128xf32>
    %cst_49 = arith.constant 5.000000e-01 : f32
    %168 = vector.broadcast %cst_49 : f32 to vector<16x128xf32>
    %169 = arith.subf %167, %168 : vector<16x128xf32>
    %cst_50 = arith.constant 0.000000e+00 : f32
    %170 = vector.broadcast %cst_50 : f32 to vector<16x128xf32>
    %171 = arith.maximumf %169, %170 : vector<16x128xf32>
    %172 = vector.shape_cast %171 : vector<16x128xf32> to vector<1x16x128xf32>
    %cst_51 = arith.constant dense<0.000000e+00> : vector<1xf32>
    %173 = vector.multi_reduction <add>, %172, %cst_51 [1, 2] : vector<1x16x128xf32> to vector<1xf32>
    %174 = vector.shape_cast %173 : vector<1xf32> to vector<1x1x1xf32>
    %175 = vector.extract %174[0, 0, 0] : f32 from vector<1x1x1xf32>
    %cst_52 = arith.constant 2.500000e+01 : f32
    %176 = arith.mulf %cst_52, %175 : f32
    %177 = arith.addf %149, %176 : f32
    %c1_i32_53 = arith.constant 1 : i32
    %178 = tpu.dynamic_rotate %171 by %c1_i32_53 dim 0 : vector<16x128xf32>, i32 -> vector<16x128xf32>
    %179 = vector.broadcast %23 : vector<16x1xf32> to vector<16x128xf32>
    %180 = arith.mulf %178, %179 : vector<16x128xf32>
    %c15_i32_54 = arith.constant 15 : i32
    %181 = tpu.dynamic_rotate %171 by %c15_i32_54 dim 0 : vector<16x128xf32>, i32 -> vector<16x128xf32>
    %182 = vector.broadcast %27 : vector<16x1xf32> to vector<16x128xf32>
    %183 = arith.mulf %181, %182 : vector<16x128xf32>
    %c1_i32_55 = arith.constant 1 : i32
    %184 = tpu.dynamic_rotate %171 by %c1_i32_55 dim 1 : vector<16x128xf32>, i32 -> vector<16x128xf32>
    %185 = vector.broadcast %31 : vector<1x128xf32> to vector<16x128xf32>
    %186 = arith.mulf %184, %185 : vector<16x128xf32>
    %c127_i32_56 = arith.constant 127 : i32
    %187 = tpu.dynamic_rotate %171 by %c127_i32_56 dim 1 : vector<16x128xf32>, i32 -> vector<16x128xf32>
    %188 = vector.broadcast %35 : vector<1x128xf32> to vector<16x128xf32>
    %189 = arith.mulf %187, %188 : vector<16x128xf32>
    %190 = arith.addf %171, %180 : vector<16x128xf32>
    %191 = arith.addf %190, %183 : vector<16x128xf32>
    %192 = arith.addf %191, %186 : vector<16x128xf32>
    %193 = arith.addf %192, %189 : vector<16x128xf32>
    %cst_57 = arith.constant 2.000000e-01 : f32
    %194 = vector.broadcast %cst_57 : f32 to vector<16x128xf32>
    %195 = arith.mulf %194, %193 : vector<16x128xf32>
    %cst_58 = arith.constant 5.000000e-01 : f32
    %196 = vector.broadcast %cst_58 : f32 to vector<16x128xf32>
    %197 = arith.subf %195, %196 : vector<16x128xf32>
    %cst_59 = arith.constant 0.000000e+00 : f32
    %198 = vector.broadcast %cst_59 : f32 to vector<16x128xf32>
    %199 = arith.maximumf %197, %198 : vector<16x128xf32>
    %200 = vector.shape_cast %199 : vector<16x128xf32> to vector<1x16x128xf32>
    %cst_60 = arith.constant dense<0.000000e+00> : vector<1xf32>
    %201 = vector.multi_reduction <add>, %200, %cst_60 [1, 2] : vector<1x16x128xf32> to vector<1xf32>
    %202 = vector.shape_cast %201 : vector<1xf32> to vector<1x1x1xf32>
    %203 = vector.extract %202[0, 0, 0] : f32 from vector<1x1x1xf32>
    %cst_61 = arith.constant 3.600000e+01 : f32
    %204 = arith.mulf %cst_61, %203 : f32
    %205 = arith.addf %177, %204 : f32
    %c1_i32_62 = arith.constant 1 : i32
    %206 = tpu.dynamic_rotate %199 by %c1_i32_62 dim 0 : vector<16x128xf32>, i32 -> vector<16x128xf32>
    %207 = vector.broadcast %23 : vector<16x1xf32> to vector<16x128xf32>
    %208 = arith.mulf %206, %207 : vector<16x128xf32>
    %c15_i32_63 = arith.constant 15 : i32
    %209 = tpu.dynamic_rotate %199 by %c15_i32_63 dim 0 : vector<16x128xf32>, i32 -> vector<16x128xf32>
    %210 = vector.broadcast %27 : vector<16x1xf32> to vector<16x128xf32>
    %211 = arith.mulf %209, %210 : vector<16x128xf32>
    %c1_i32_64 = arith.constant 1 : i32
    %212 = tpu.dynamic_rotate %199 by %c1_i32_64 dim 1 : vector<16x128xf32>, i32 -> vector<16x128xf32>
    %213 = vector.broadcast %31 : vector<1x128xf32> to vector<16x128xf32>
    %214 = arith.mulf %212, %213 : vector<16x128xf32>
    %c127_i32_65 = arith.constant 127 : i32
    %215 = tpu.dynamic_rotate %199 by %c127_i32_65 dim 1 : vector<16x128xf32>, i32 -> vector<16x128xf32>
    %216 = vector.broadcast %35 : vector<1x128xf32> to vector<16x128xf32>
    %217 = arith.mulf %215, %216 : vector<16x128xf32>
    %218 = arith.addf %199, %208 : vector<16x128xf32>
    %219 = arith.addf %218, %211 : vector<16x128xf32>
    %220 = arith.addf %219, %214 : vector<16x128xf32>
    %221 = arith.addf %220, %217 : vector<16x128xf32>
    %cst_66 = arith.constant 2.000000e-01 : f32
    %222 = vector.broadcast %cst_66 : f32 to vector<16x128xf32>
    %223 = arith.mulf %222, %221 : vector<16x128xf32>
    %cst_67 = arith.constant 5.000000e-01 : f32
    %224 = vector.broadcast %cst_67 : f32 to vector<16x128xf32>
    %225 = arith.subf %223, %224 : vector<16x128xf32>
    %cst_68 = arith.constant 0.000000e+00 : f32
    %226 = vector.broadcast %cst_68 : f32 to vector<16x128xf32>
    %227 = arith.maximumf %225, %226 : vector<16x128xf32>
    %228 = vector.shape_cast %227 : vector<16x128xf32> to vector<1x16x128xf32>
    %cst_69 = arith.constant dense<0.000000e+00> : vector<1xf32>
    %229 = vector.multi_reduction <add>, %228, %cst_69 [1, 2] : vector<1x16x128xf32> to vector<1xf32>
    %230 = vector.shape_cast %229 : vector<1xf32> to vector<1x1x1xf32>
    %231 = vector.extract %230[0, 0, 0] : f32 from vector<1x1x1xf32>
    %cst_70 = arith.constant 4.900000e+01 : f32
    %232 = arith.mulf %cst_70, %231 : f32
    %233 = arith.addf %205, %232 : f32
    %c1_i32_71 = arith.constant 1 : i32
    %234 = tpu.dynamic_rotate %227 by %c1_i32_71 dim 0 : vector<16x128xf32>, i32 -> vector<16x128xf32>
    %235 = vector.broadcast %23 : vector<16x1xf32> to vector<16x128xf32>
    %236 = arith.mulf %234, %235 : vector<16x128xf32>
    %c15_i32_72 = arith.constant 15 : i32
    %237 = tpu.dynamic_rotate %227 by %c15_i32_72 dim 0 : vector<16x128xf32>, i32 -> vector<16x128xf32>
    %238 = vector.broadcast %27 : vector<16x1xf32> to vector<16x128xf32>
    %239 = arith.mulf %237, %238 : vector<16x128xf32>
    %c1_i32_73 = arith.constant 1 : i32
    %240 = tpu.dynamic_rotate %227 by %c1_i32_73 dim 1 : vector<16x128xf32>, i32 -> vector<16x128xf32>
    %241 = vector.broadcast %31 : vector<1x128xf32> to vector<16x128xf32>
    %242 = arith.mulf %240, %241 : vector<16x128xf32>
    %c127_i32_74 = arith.constant 127 : i32
    %243 = tpu.dynamic_rotate %227 by %c127_i32_74 dim 1 : vector<16x128xf32>, i32 -> vector<16x128xf32>
    %244 = vector.broadcast %35 : vector<1x128xf32> to vector<16x128xf32>
    %245 = arith.mulf %243, %244 : vector<16x128xf32>
    %246 = arith.addf %227, %236 : vector<16x128xf32>
    %247 = arith.addf %246, %239 : vector<16x128xf32>
    %248 = arith.addf %247, %242 : vector<16x128xf32>
    %249 = arith.addf %248, %245 : vector<16x128xf32>
    %cst_75 = arith.constant 2.000000e-01 : f32
    %250 = vector.broadcast %cst_75 : f32 to vector<16x128xf32>
    %251 = arith.mulf %250, %249 : vector<16x128xf32>
    %cst_76 = arith.constant 5.000000e-01 : f32
    %252 = vector.broadcast %cst_76 : f32 to vector<16x128xf32>
    %253 = arith.subf %251, %252 : vector<16x128xf32>
    %cst_77 = arith.constant 0.000000e+00 : f32
    %254 = vector.broadcast %cst_77 : f32 to vector<16x128xf32>
    %255 = arith.maximumf %253, %254 : vector<16x128xf32>
    %256 = vector.shape_cast %255 : vector<16x128xf32> to vector<1x16x128xf32>
    %cst_78 = arith.constant dense<0.000000e+00> : vector<1xf32>
    %257 = vector.multi_reduction <add>, %256, %cst_78 [1, 2] : vector<1x16x128xf32> to vector<1xf32>
    %258 = vector.shape_cast %257 : vector<1xf32> to vector<1x1x1xf32>
    %259 = vector.extract %258[0, 0, 0] : f32 from vector<1x1x1xf32>
    %cst_79 = arith.constant 6.400000e+01 : f32
    %260 = arith.mulf %cst_79, %259 : f32
    %261 = arith.addf %233, %260 : f32
    %c1_i32_80 = arith.constant 1 : i32
    %262 = tpu.dynamic_rotate %255 by %c1_i32_80 dim 0 : vector<16x128xf32>, i32 -> vector<16x128xf32>
    %263 = vector.broadcast %23 : vector<16x1xf32> to vector<16x128xf32>
    %264 = arith.mulf %262, %263 : vector<16x128xf32>
    %c15_i32_81 = arith.constant 15 : i32
    %265 = tpu.dynamic_rotate %255 by %c15_i32_81 dim 0 : vector<16x128xf32>, i32 -> vector<16x128xf32>
    %266 = vector.broadcast %27 : vector<16x1xf32> to vector<16x128xf32>
    %267 = arith.mulf %265, %266 : vector<16x128xf32>
    %c1_i32_82 = arith.constant 1 : i32
    %268 = tpu.dynamic_rotate %255 by %c1_i32_82 dim 1 : vector<16x128xf32>, i32 -> vector<16x128xf32>
    %269 = vector.broadcast %31 : vector<1x128xf32> to vector<16x128xf32>
    %270 = arith.mulf %268, %269 : vector<16x128xf32>
    %c127_i32_83 = arith.constant 127 : i32
    %271 = tpu.dynamic_rotate %255 by %c127_i32_83 dim 1 : vector<16x128xf32>, i32 -> vector<16x128xf32>
    %272 = vector.broadcast %35 : vector<1x128xf32> to vector<16x128xf32>
    %273 = arith.mulf %271, %272 : vector<16x128xf32>
    %274 = arith.addf %255, %264 : vector<16x128xf32>
    %275 = arith.addf %274, %267 : vector<16x128xf32>
    %276 = arith.addf %275, %270 : vector<16x128xf32>
    %277 = arith.addf %276, %273 : vector<16x128xf32>
    %cst_84 = arith.constant 2.000000e-01 : f32
    %278 = vector.broadcast %cst_84 : f32 to vector<16x128xf32>
    %279 = arith.mulf %278, %277 : vector<16x128xf32>
    %cst_85 = arith.constant 5.000000e-01 : f32
    %280 = vector.broadcast %cst_85 : f32 to vector<16x128xf32>
    %281 = arith.subf %279, %280 : vector<16x128xf32>
    %cst_86 = arith.constant 0.000000e+00 : f32
    %282 = vector.broadcast %cst_86 : f32 to vector<16x128xf32>
    %283 = arith.maximumf %281, %282 : vector<16x128xf32>
    %284 = vector.shape_cast %283 : vector<16x128xf32> to vector<1x16x128xf32>
    %cst_87 = arith.constant dense<0.000000e+00> : vector<1xf32>
    %285 = vector.multi_reduction <add>, %284, %cst_87 [1, 2] : vector<1x16x128xf32> to vector<1xf32>
    %286 = vector.shape_cast %285 : vector<1xf32> to vector<1x1x1xf32>
    %287 = vector.extract %286[0, 0, 0] : f32 from vector<1x1x1xf32>
    %cst_88 = arith.constant 8.100000e+01 : f32
    %288 = arith.mulf %cst_88, %287 : f32
    %289 = arith.addf %261, %288 : f32
    %c1_i32_89 = arith.constant 1 : i32
    %290 = tpu.dynamic_rotate %283 by %c1_i32_89 dim 0 : vector<16x128xf32>, i32 -> vector<16x128xf32>
    %291 = vector.broadcast %23 : vector<16x1xf32> to vector<16x128xf32>
    %292 = arith.mulf %290, %291 : vector<16x128xf32>
    %c15_i32_90 = arith.constant 15 : i32
    %293 = tpu.dynamic_rotate %283 by %c15_i32_90 dim 0 : vector<16x128xf32>, i32 -> vector<16x128xf32>
    %294 = vector.broadcast %27 : vector<16x1xf32> to vector<16x128xf32>
    %295 = arith.mulf %293, %294 : vector<16x128xf32>
    %c1_i32_91 = arith.constant 1 : i32
    %296 = tpu.dynamic_rotate %283 by %c1_i32_91 dim 1 : vector<16x128xf32>, i32 -> vector<16x128xf32>
    %297 = vector.broadcast %31 : vector<1x128xf32> to vector<16x128xf32>
    %298 = arith.mulf %296, %297 : vector<16x128xf32>
    %c127_i32_92 = arith.constant 127 : i32
    %299 = tpu.dynamic_rotate %283 by %c127_i32_92 dim 1 : vector<16x128xf32>, i32 -> vector<16x128xf32>
    %300 = vector.broadcast %35 : vector<1x128xf32> to vector<16x128xf32>
    %301 = arith.mulf %299, %300 : vector<16x128xf32>
    %302 = arith.addf %283, %292 : vector<16x128xf32>
    %303 = arith.addf %302, %295 : vector<16x128xf32>
    %304 = arith.addf %303, %298 : vector<16x128xf32>
    %305 = arith.addf %304, %301 : vector<16x128xf32>
    %cst_93 = arith.constant 2.000000e-01 : f32
    %306 = vector.broadcast %cst_93 : f32 to vector<16x128xf32>
    %307 = arith.mulf %306, %305 : vector<16x128xf32>
    %cst_94 = arith.constant 5.000000e-01 : f32
    %308 = vector.broadcast %cst_94 : f32 to vector<16x128xf32>
    %309 = arith.subf %307, %308 : vector<16x128xf32>
    %cst_95 = arith.constant 0.000000e+00 : f32
    %310 = vector.broadcast %cst_95 : f32 to vector<16x128xf32>
    %311 = arith.maximumf %309, %310 : vector<16x128xf32>
    %312 = vector.shape_cast %311 : vector<16x128xf32> to vector<1x16x128xf32>
    %cst_96 = arith.constant dense<0.000000e+00> : vector<1xf32>
    %313 = vector.multi_reduction <add>, %312, %cst_96 [1, 2] : vector<1x16x128xf32> to vector<1xf32>
    %314 = vector.shape_cast %313 : vector<1xf32> to vector<1x1x1xf32>
    %315 = vector.extract %314[0, 0, 0] : f32 from vector<1x1x1xf32>
    %cst_97 = arith.constant 1.000000e+02 : f32
    %316 = arith.mulf %cst_97, %315 : f32
    %317 = arith.addf %289, %316 : f32
    %318 = vector.broadcast %317 : f32 to vector<1x8x128xf32>
    %c0_98 = arith.constant 0 : index
    %c0_99 = arith.constant 0 : index
    %c0_100 = arith.constant 0 : index
    %319 = vector.load %arg3[%c0_98, %c0_99, %c0_100] : memref<1x8x128xf32, #tpu.memory_space<vmem>>, vector<1x8x128xf32>
    tpu.vector_store %arg3[%c0_98, %c0_99, %c0_100], %318 {strides = array<i32>} : memref<1x8x128xf32, #tpu.memory_space<vmem>>, vector<1x8x128xf32>,
    return
  }
  func.func @transform_0(%arg0: i32) -> (i32, i32) {
    %c0_i32 = arith.constant 0 : i32
    %c0_i32_0 = arith.constant 0 : i32
    return %c0_i32, %arg0 : i32, i32
  }
  func.func @transform_1(%arg0: i32) -> (i32, i32) {
    %c0_i32 = arith.constant 0 : i32
    %c0_i32_0 = arith.constant 0 : i32
    return %c0_i32, %arg0 : i32, i32
  }
  func.func @transform_2(%arg0: i32) -> (i32, i32, i32) {
    %c0_i32 = arith.constant 0 : i32
    %c0_i32_0 = arith.constant 0 : i32
    %c0_i32_1 = arith.constant 0 : i32
    return %arg0, %c0_i32, %c0_i32_0 : i32, i32, i32
  }
}

</mosaic_0001>

<llo_original>
// kernel: tpu_custom_call.1
$region0: #{tpu_custom_call.1}
  #allocation0 [shape = 'u32[]', space=smem, size = 0x4, offset = 0x4, fixed_abs, tag = 'smem constant byte address 0x4 - core index']
  #allocation1 [shape = 'u32[144,128]{1,0:T(1,128)}', space=vmem, size = 0x12000, scoped, tag = 'internal scratch']
  %s0 = inlined_call_operand.hbm [shape: f32[16,128], index: 0, kind: input, shape index: {}]
  %s1 = inlined_call_operand.hbm [shape: f32[16,128], index: 1, kind: input, shape index: {}]
  %s2 = inlined_call_operand.hbm [shape: f32[1,8,128], index: 2, kind: output, shape index: {}]
  %s3 = sld [smem:[#allocation0]]
  $region26: #{tpu_custom_call.1} parent=0
    _
  %s5 = ssub.s32 1, %s3
  %s6 = scalar_select 0, %s5, %s3
  $region1: #{tpu_custom_call.1} parent=0
    #allocation2 [shape = 'u8[8192]{0}', space=vmem, size = 0x2000, scoped, tag = 'input window, operand 0, single buffered']
    #allocation3 [shape = 's32[1]{0}', space=sflag, size = 0x4, scoped, tag = 'scoped memory for tpu_custom_call.1']
    #allocation4 [shape = 's32[1]{0}', space=sflag, size = 0x4, scoped, tag = 'scoped memory for tpu_custom_call.1']
    #allocation5 [shape = 'u8[8192]{0}', space=vmem, size = 0x2000, scoped, tag = 'input window, operand 1, single buffered']
    #allocation6 [shape = 's32[1]{0}', space=sflag, size = 0x4, scoped, tag = 'scoped memory for tpu_custom_call.1']
    #allocation7 [shape = 'u8[4096]{0}', space=vmem, size = 0x1000, scoped, tag = 'output window, operand 0, single buffered']
    %7 = vsyncpa [#allocation3], 0
    %8 = vsyncpa [#allocation6], 0
    %9 = vsyncpa [#allocation4], 0
    // Predicated region
    $region2: #{tpu_custom_call.1} parent=1 // pred_check
      _
    $region3: #{tpu_custom_call.1} parent=1 // pred_check_branch
      %11 = sbr.rel (0) target = $region5
    $region4: #{tpu_custom_call.1} parent=1 // pred_region
      %s13 = ssub.s32 256, 256
      %14 = vsyncadd [#allocation3], %s13
      %s15 = sshll.u32 [#allocation2], 4
      %s16 = int_to_ptr.vmem [resolvable:$true] %s15
      %21 = dma.hbm_to_vmem [thread:$0]  %s0, 256, %s16, [#allocation3], 128, 128, 8
    $region5: #{tpu_custom_call.1} parent=1 // pred_fallthru
      _
    // Predicated region
    $region6: #{tpu_custom_call.1} parent=1 // pred_check
      _
    $region7: #{tpu_custom_call.1} parent=1 // pred_check_branch
      %23 = sbr.rel (0) target = $region9
    $region8: #{tpu_custom_call.1} parent=1 // pred_region
      %s25 = ssub.s32 256, 256
      %26 = vsyncadd [#allocation6], %s25
      %s27 = sshll.u32 [#allocation5], 4
      %s28 = int_to_ptr.vmem [resolvable:$true] %s27
      %33 = dma.hbm_to_vmem [thread:$0]  %s1, 256, %s28, [#allocation6], 128, 128, 8
    $region9: #{tpu_custom_call.1} parent=1 // pred_fallthru
      _
    // Predicated region
    $region10: #{tpu_custom_call.1} parent=1 // pred_check
      _
    $region11: #{tpu_custom_call.1} parent=1 // pred_check_branch
      %35 = sbr.rel (0) target = $region13
    $region12: #{tpu_custom_call.1} parent=1 // pred_region
      %36 = dma.done [#allocation3], 256
    $region13: #{tpu_custom_call.1} parent=1 // pred_fallthru
      _
    // Predicated region
    $region14: #{tpu_custom_call.1} parent=1 // pred_check
      _
    $region15: #{tpu_custom_call.1} parent=1 // pred_check_branch
      %38 = sbr.rel (0) target = $region17
    $region16: #{tpu_custom_call.1} parent=1 // pred_region
      %39 = dma.done [#allocation6], 256
    $region17: #{tpu_custom_call.1} parent=1 // pred_fallthru
      _
    %v40 = vld [vmem:[#allocation2] sm:$0xff]
    %v41 = vld [vmem:[#allocation2 + $0x8] sm:$0xff]
    %v42 = vld [vmem:[#allocation5] sm:$0xff]
    %v43 = vld [vmem:[#allocation5 + $0x8] sm:$0xff]
    %v44 = vlaneseq
    %v45 = vshrl.u32 %v44, 7
    %v46 = vadd.s32 %v45, 8
    %v47 = vlaneseq
    %v48 = vand.u32 %v47, 127
    %vm49 = vcmp.lt.s32.totalorder %v48, 0
    %v50 = vsub.s32 0, %v48
    %v51 = vsel %vm49, %v50, %v48
    %v52 = vshrl.u32 %v51, 4
    %v53 = vand.u32 %v51, 15
    %v54 = vsub.s32 0, %v53
    %v55 = vsel %vm49, %v54, %v53
    %vm56 = vcmp.ne.s32.totalorder %v55, 0
    %vm57 = vcmp.lt.s32.totalorder %v55, 0
    %vm58 = vmand %vm57, %vm56
    %v59 = vadd.s32 %v55, 16
    %v60 = vsel %vm58, %v59, %v55
    %vm61 = vcmp.ne.s32.totalorder %v45, 0
    %vm62 = vcmp.ne.s32.totalorder %v46, 0
    %v63 = vsel %vm61, 1, 0
    %v64 = vsel %vm62, 1, 0
    %v65 = vcvt.s32.f32 %v63
    %v66 = vcvt.s32.f32 %v64
    %vm67 = vcmp.ne.s32.totalorder %v45, 15
    %vm68 = vcmp.ne.s32.totalorder %v46, 15
    %v69 = vsel %vm67, 1, 0
    %v70 = vsel %vm68, 1, 0
    %v71 = vcvt.s32.f32 %v69
    %v72 = vcvt.s32.f32 %v70
    %vm73 = vcmp.ne.s32.totalorder %v60, 0
    %v74 = vsel %vm73, 1, 0
    %v75 = vcvt.s32.f32 %v74
    %vm76 = vcmp.ne.s32.totalorder %v60, 15
    %v77 = vsel %vm76, 1, 0
    %v78 = vcvt.s32.f32 %v77
    %v79 = vsub.f32 %v40, %v42
    %v80 = vsub.f32 %v41, %v43
    %v81 = vmul.f32 %v79, %v79
    %v82 = vmul.f32 %v80, %v80
    %v83 = vrot.slane %v81, 7
    %v84 = vrot.slane %v82, 7
    %vm85 = vcmp.lt.s32.totalorder %v45, 1
    %v86 = vsel %vm85, %v83, %v84
    %v87 = vsel %vm85, %v84, %v83
    %v88 = vmul.f32 %v87, %v65
    %v89 = vmul.f32 %v86, %v66
    %v90 = vrot.slane %v81, 1
    %v91 = vrot.slane %v82, 1
    %vm92 = vcmp.lt.s32.totalorder %v45, 7
    %v93 = vsel %vm92, %v90, %v91
    %v94 = vsel %vm92, %v91, %v90
    %v95 = vmul.f32 %v93, %v71
    %v96 = vmul.f32 %v94, %v72
    %97 = vrot.lane.b32.xlu0 %v81, 1
    %v98 = vpop.permute.xlu0 %97
    %99 = vrot.lane.b32.xlu0 %v82, 1
    %v100 = vpop.permute.xlu0 %99
    %v101 = vmul.f32 %v98, %v75
    %v102 = vmul.f32 %v100, %v75
    %103 = vrot.lane.b32.xlu0 %v81, 127
    %v104 = vpop.permute.xlu0 %103
    %105 = vrot.lane.b32.xlu0 %v82, 127
    %v106 = vpop.permute.xlu0 %105
    %v107 = vmul.f32 %v104, %v78
    %v108 = vmul.f32 %v106, %v78
    %v109 = vadd.f32 %v81, %v88
    %v110 = vadd.f32 %v82, %v89
    %v111 = vadd.f32 %v109, %v95
    %v112 = vadd.f32 %v110, %v96
    %v113 = vadd.f32 %v111, %v101
    %v114 = vadd.f32 %v112, %v102
    %v115 = vadd.f32 %v113, %v107
    %v116 = vadd.f32 %v114, %v108
    %v117 = vmul.f32 %v115, 0.2
    %v118 = vmul.f32 %v116, 0.2
    %v119 = vsub.f32 %v117, 0.5
    %v120 = vsub.f32 %v118, 0.5
    %v121 = vmax.f32 %v119, 0.0
    %v122 = vmax.f32 %v120, 0.0
    %v123 = vadd.f32 %v121, %v122
    %124 = vadd.xlane.f32.xlu0 %v123
    %v125 = vpop.xlane.xlu0 %124
    %v126 = vrot.slane %v125, 4
    %v127 = vadd.f32 %v125, %v126
    %v128 = vrot.slane %v127, 2
    %v129 = vadd.f32 %v127, %v128
    %v130 = vrot.slane %v129, 1
    %v131 = vadd.f32 %v129, %v130
    %s132 = vtos %v131
    %s133 = sadd.f32 %s132, 0.0
    %v134 = vrot.slane %v121, 7
    %v135 = vrot.slane %v122, 7
    %v136 = vsel %vm85, %v134, %v135
    %v137 = vsel %vm85, %v135, %v134
    %v138 = vmul.f32 %v137, %v65
    %v139 = vmul.f32 %v136, %v66
    %v140 = vrot.slane %v121, 1
    %v141 = vrot.slane %v122, 1
    %v142 = vsel %vm92, %v140, %v141
    %v143 = vsel %vm92, %v141, %v140
    %v144 = vmul.f32 %v142, %v71
    %v145 = vmul.f32 %v143, %v72
    %146 = vrot.lane.b32.xlu0 %v121, 1
    %v147 = vpop.permute.xlu0 %146
    %148 = vrot.lane.b32.xlu0 %v122, 1
    %v149 = vpop.permute.xlu0 %148
    %v150 = vmul.f32 %v147, %v75
    %v151 = vmul.f32 %v149, %v75
    %152 = vrot.lane.b32.xlu0 %v121, 127
    %v153 = vpop.permute.xlu0 %152
    %154 = vrot.lane.b32.xlu0 %v122, 127
    %v155 = vpop.permute.xlu0 %154
    %v156 = vmul.f32 %v153, %v78
    %v157 = vmul.f32 %v155, %v78
    %v158 = vadd.f32 %v121, %v138
    %v159 = vadd.f32 %v122, %v139
    %v160 = vadd.f32 %v158, %v144
    %v161 = vadd.f32 %v159, %v145
    %v162 = vadd.f32 %v160, %v150
    %v163 = vadd.f32 %v161, %v151
    %v164 = vadd.f32 %v162, %v156
    %v165 = vadd.f32 %v163, %v157
    %v166 = vmul.f32 %v164, 0.2
    %v167 = vmul.f32 %v165, 0.2
    %v168 = vsub.f32 %v166, 0.5
    %v169 = vsub.f32 %v167, 0.5
    %v170 = vmax.f32 %v168, 0.0
    %v171 = vmax.f32 %v169, 0.0
    %v172 = vadd.f32 %v170, %v171
    %173 = vadd.xlane.f32.xlu0 %v172
    %v174 = vpop.xlane.xlu0 %173
    %v175 = vrot.slane %v174, 4
    %v176 = vadd.f32 %v174, %v175
    %v177 = vrot.slane %v176, 2
    %v178 = vadd.f32 %v176, %v177
    %v179 = vrot.slane %v178, 1
    %v180 = vadd.f32 %v178, %v179
    %s181 = vtos %v180
    %s182 = smul.f32 %s181, 4.0
    %s183 = sadd.f32 %s133, %s182
    %v184 = vrot.slane %v170, 7
    %v185 = vrot.slane %v171, 7
    %v186 = vsel %vm85, %v184, %v185
    %v187 = vsel %vm85, %v185, %v184
    %v188 = vmul.f32 %v187, %v65
    %v189 = vmul.f32 %v186, %v66
    %v190 = vrot.slane %v170, 1
    %v191 = vrot.slane %v171, 1
    %v192 = vsel %vm92, %v190, %v191
    %v193 = vsel %vm92, %v191, %v190
    %v194 = vmul.f32 %v192, %v71
    %v195 = vmul.f32 %v193, %v72
    %196 = vrot.lane.b32.xlu0 %v170, 1
    %v197 = vpop.permute.xlu0 %196
    %198 = vrot.lane.b32.xlu0 %v171, 1
    %v199 = vpop.permute.xlu0 %198
    %v200 = vmul.f32 %v197, %v75
    %v201 = vmul.f32 %v199, %v75
    %202 = vrot.lane.b32.xlu0 %v170, 127
    %v203 = vpop.permute.xlu0 %202
    %204 = vrot.lane.b32.xlu0 %v171, 127
    %v205 = vpop.permute.xlu0 %204
    %v206 = vmul.f32 %v203, %v78
    %v207 = vmul.f32 %v205, %v78
    %v208 = vadd.f32 %v170, %v188
    %v209 = vadd.f32 %v171, %v189
    %v210 = vadd.f32 %v208, %v194
    %v211 = vadd.f32 %v209, %v195
    %v212 = vadd.f32 %v210, %v200
    %v213 = vadd.f32 %v211, %v201
    %v214 = vadd.f32 %v212, %v206
    %v215 = vadd.f32 %v213, %v207
    %v216 = vmul.f32 %v214, 0.2
    %v217 = vmul.f32 %v215, 0.2
    %v218 = vsub.f32 %v216, 0.5
    %v219 = vsub.f32 %v217, 0.5
    %v220 = vmax.f32 %v218, 0.0
    %v221 = vmax.f32 %v219, 0.0
    %v222 = vadd.f32 %v220, %v221
    %223 = vadd.xlane.f32.xlu0 %v222
    %v224 = vpop.xlane.xlu0 %223
    %v225 = vrot.slane %v224, 4
    %v226 = vadd.f32 %v224, %v225
    %v227 = vrot.slane %v226, 2
    %v228 = vadd.f32 %v226, %v227
    %v229 = vrot.slane %v228, 1
    %v230 = vadd.f32 %v228, %v229
    %s231 = vtos %v230
    %s232 = smul.f32 %s231, 9.0
    %s233 = sadd.f32 %s183, %s232
    %v234 = vrot.slane %v220, 7
    %v235 = vrot.slane %v221, 7
    %v236 = vsel %vm85, %v234, %v235
    %v237 = vsel %vm85, %v235, %v234
    %v238 = vmul.f32 %v237, %v65
    %v239 = vmul.f32 %v236, %v66
    %v240 = vrot.slane %v220, 1
    %v241 = vrot.slane %v221, 1
    %v242 = vsel %vm92, %v240, %v241
    %v243 = vsel %vm92, %v241, %v240
    %v244 = vmul.f32 %v242, %v71
    %v245 = vmul.f32 %v243, %v72
    %246 = vrot.lane.b32.xlu0 %v220, 1
    %v247 = vpop.permute.xlu0 %246
    %248 = vrot.lane.b32.xlu0 %v221, 1
    %v249 = vpop.permute.xlu0 %248
    %v250 = vmul.f32 %v247, %v75
    %v251 = vmul.f32 %v249, %v75
    %252 = vrot.lane.b32.xlu0 %v220, 127
    %v253 = vpop.permute.xlu0 %252
    %254 = vrot.lane.b32.xlu0 %v221, 127
    %v255 = vpop.permute.xlu0 %254
    %v256 = vmul.f32 %v253, %v78
    %v257 = vmul.f32 %v255, %v78
    %v258 = vadd.f32 %v220, %v238
    %v259 = vadd.f32 %v221, %v239
    %v260 = vadd.f32 %v258, %v244
    %v261 = vadd.f32 %v259, %v245
    %v262 = vadd.f32 %v260, %v250
    %v263 = vadd.f32 %v261, %v251
    %v264 = vadd.f32 %v262, %v256
    %v265 = vadd.f32 %v263, %v257
    %v266 = vmul.f32 %v264, 0.2
    %v267 = vmul.f32 %v265, 0.2
    %v268 = vsub.f32 %v266, 0.5
    %v269 = vsub.f32 %v267, 0.5
    %v270 = vmax.f32 %v268, 0.0
    %v271 = vmax.f32 %v269, 0.0
    %v272 = vadd.f32 %v270, %v271
    %273 = vadd.xlane.f32.xlu0 %v272
    %v274 = vpop.xlane.xlu0 %273
    %v275 = vrot.slane %v274, 4
    %v276 = vadd.f32 %v274, %v275
    %v277 = vrot.slane %v276, 2
    %v278 = vadd.f32 %v276, %v277
    %v279 = vrot.slane %v278, 1
    %v280 = vadd.f32 %v278, %v279
    %s281 = vtos %v280
    %s282 = smul.f32 %s281, 16.0
    %s283 = sadd.f32 %s233, %s282
    %v284 = vrot.slane %v270, 7
    %v285 = vrot.slane %v271, 7
    %v286 = vsel %vm85, %v284, %v285
    %v287 = vsel %vm85, %v285, %v284
    %v288 = vmul.f32 %v287, %v65
    %v289 = vmul.f32 %v286, %v66
    %v290 = vrot.slane %v270, 1
    %v291 = vrot.slane %v271, 1
    %v292 = vsel %vm92, %v290, %v291
    %v293 = vsel %vm92, %v291, %v290
    %v294 = vmul.f32 %v292, %v71
    %v295 = vmul.f32 %v293, %v72
    %296 = vrot.lane.b32.xlu0 %v270, 1
    %v297 = vpop.permute.xlu0 %296
    %298 = vrot.lane.b32.xlu0 %v271, 1
    %v299 = vpop.permute.xlu0 %298
    %v300 = vmul.f32 %v297, %v75
    %v301 = vmul.f32 %v299, %v75
    %302 = vrot.lane.b32.xlu0 %v270, 127
    %v303 = vpop.permute.xlu0 %302
    %304 = vrot.lane.b32.xlu0 %v271, 127
    %v305 = vpop.permute.xlu0 %304
    %v306 = vmul.f32 %v303, %v78
    %v307 = vmul.f32 %v305, %v78
    %v308 = vadd.f32 %v270, %v288
    %v309 = vadd.f32 %v271, %v289
    %v310 = vadd.f32 %v308, %v294
    %v311 = vadd.f32 %v309, %v295
    %v312 = vadd.f32 %v310, %v300
    %v313 = vadd.f32 %v311, %v301
    %v314 = vadd.f32 %v312, %v306
    %v315 = vadd.f32 %v313, %v307
    %v316 = vmul.f32 %v314, 0.2
    %v317 = vmul.f32 %v315, 0.2
    %v318 = vsub.f32 %v316, 0.5
    %v319 = vsub.f32 %v317, 0.5
    %v320 = vmax.f32 %v318, 0.0
    %v321 = vmax.f32 %v319, 0.0
    %v322 = vadd.f32 %v320, %v321
    %323 = vadd.xlane.f32.xlu0 %v322
    %v324 = vpop.xlane.xlu0 %323
    %v325 = vrot.slane %v324, 4
    %v326 = vadd.f32 %v324, %v325
    %v327 = vrot.slane %v326, 2
    %v328 = vadd.f32 %v326, %v327
    %v329 = vrot.slane %v328, 1
    %v330 = vadd.f32 %v328, %v329
    %s331 = vtos %v330
    %s332 = smul.f32 %s331, 25.0
    %s333 = sadd.f32 %s283, %s332
    %v334 = vrot.slane %v320, 7
    %v335 = vrot.slane %v321, 7
    %v336 = vsel %vm85, %v334, %v335
    %v337 = vsel %vm85, %v335, %v334
    %v338 = vmul.f32 %v337, %v65
    %v339 = vmul.f32 %v336, %v66
    %v340 = vrot.slane %v320, 1
    %v341 = vrot.slane %v321, 1
    %v342 = vsel %vm92, %v340, %v341
    %v343 = vsel %vm92, %v341, %v340
    %v344 = vmul.f32 %v342, %v71
    %v345 = vmul.f32 %v343, %v72
    %346 = vrot.lane.b32.xlu0 %v320, 1
    %v347 = vpop.permute.xlu0 %346
    %348 = vrot.lane.b32.xlu0 %v321, 1
    %v349 = vpop.permute.xlu0 %348
    %v350 = vmul.f32 %v347, %v75
    %v351 = vmul.f32 %v349, %v75
    %352 = vrot.lane.b32.xlu0 %v320, 127
    %v353 = vpop.permute.xlu0 %352
    %354 = vrot.lane.b32.xlu0 %v321, 127
    %v355 = vpop.permute.xlu0 %354
    %v356 = vmul.f32 %v353, %v78
    %v357 = vmul.f32 %v355, %v78
    %v358 = vadd.f32 %v320, %v338
    %v359 = vadd.f32 %v321, %v339
    %v360 = vadd.f32 %v358, %v344
    %v361 = vadd.f32 %v359, %v345
    %v362 = vadd.f32 %v360, %v350
    %v363 = vadd.f32 %v361, %v351
    %v364 = vadd.f32 %v362, %v356
    %v365 = vadd.f32 %v363, %v357
    %v366 = vmul.f32 %v364, 0.2
    %v367 = vmul.f32 %v365, 0.2
    %v368 = vsub.f32 %v366, 0.5
    %v369 = vsub.f32 %v367, 0.5
    %v370 = vmax.f32 %v368, 0.0
    %v371 = vmax.f32 %v369, 0.0
    %v372 = vadd.f32 %v370, %v371
    %373 = vadd.xlane.f32.xlu0 %v372
    %v374 = vpop.xlane.xlu0 %373
    %v375 = vrot.slane %v374, 4
    %v376 = vadd.f32 %v374, %v375
    %v377 = vrot.slane %v376, 2
    %v378 = vadd.f32 %v376, %v377
    %v379 = vrot.slane %v378, 1
    %v380 = vadd.f32 %v378, %v379
    %s381 = vtos %v380
    %s382 = smul.f32 %s381, 36.0
    %s383 = sadd.f32 %s333, %s382
    %v384 = vrot.slane %v370, 7
    %v385 = vrot.slane %v371, 7
    %v386 = vsel %vm85, %v384, %v385
    %v387 = vsel %vm85, %v385, %v384
    %v388 = vmul.f32 %v387, %v65
    %v389 = vmul.f32 %v386, %v66
    %v390 = vrot.slane %v370, 1
    %v391 = vrot.slane %v371, 1
    %v392 = vsel %vm92, %v390, %v391
    %v393 = vsel %vm92, %v391, %v390
    %v394 = vmul.f32 %v392, %v71
    %v395 = vmul.f32 %v393, %v72
    %396 = vrot.lane.b32.xlu0 %v370, 1
    %v397 = vpop.permute.xlu0 %396
    %398 = vrot.lane.b32.xlu0 %v371, 1
    %v399 = vpop.permute.xlu0 %398
    %v400 = vmul.f32 %v397, %v75
    %v401 = vmul.f32 %v399, %v75
    %402 = vrot.lane.b32.xlu0 %v370, 127
    %v403 = vpop.permute.xlu0 %402
    %404 = vrot.lane.b32.xlu0 %v371, 127
    %v405 = vpop.permute.xlu0 %404
    %v406 = vmul.f32 %v403, %v78
    %v407 = vmul.f32 %v405, %v78
    %v408 = vadd.f32 %v370, %v388
    %v409 = vadd.f32 %v371, %v389
    %v410 = vadd.f32 %v408, %v394
    %v411 = vadd.f32 %v409, %v395
    %v412 = vadd.f32 %v410, %v400
    %v413 = vadd.f32 %v411, %v401
    %v414 = vadd.f32 %v412, %v406
    %v415 = vadd.f32 %v413, %v407
    %v416 = vmul.f32 %v414, 0.2
    %v417 = vmul.f32 %v415, 0.2
    %v418 = vsub.f32 %v416, 0.5
    %v419 = vsub.f32 %v417, 0.5
    %v420 = vmax.f32 %v418, 0.0
    %v421 = vmax.f32 %v419, 0.0
    %v422 = vadd.f32 %v420, %v421
    %423 = vadd.xlane.f32.xlu0 %v422
    %v424 = vpop.xlane.xlu0 %423
    %v425 = vrot.slane %v424, 4
    %v426 = vadd.f32 %v424, %v425
    %v427 = vrot.slane %v426, 2
    %v428 = vadd.f32 %v426, %v427
    %v429 = vrot.slane %v428, 1
    %v430 = vadd.f32 %v428, %v429
    %s431 = vtos %v430
    %s432 = smul.f32 %s431, 49.0
    %s433 = sadd.f32 %s383, %s432
    %v434 = vrot.slane %v420, 7
    %v435 = vrot.slane %v421, 7
    %v436 = vsel %vm85, %v434, %v435
    %v437 = vsel %vm85, %v435, %v434
    %v438 = vmul.f32 %v437, %v65
    %v439 = vmul.f32 %v436, %v66
    %v440 = vrot.slane %v420, 1
    %v441 = vrot.slane %v421, 1
    %v442 = vsel %vm92, %v440, %v441
    %v443 = vsel %vm92, %v441, %v440
    %v444 = vmul.f32 %v442, %v71
    %v445 = vmul.f32 %v443, %v72
    %446 = vrot.lane.b32.xlu0 %v420, 1
    %v447 = vpop.permute.xlu0 %446
    %448 = vrot.lane.b32.xlu0 %v421, 1
    %v449 = vpop.permute.xlu0 %448
    %v450 = vmul.f32 %v447, %v75
    %v451 = vmul.f32 %v449, %v75
    %452 = vrot.lane.b32.xlu0 %v420, 127
    %v453 = vpop.permute.xlu0 %452
    %454 = vrot.lane.b32.xlu0 %v421, 127
    %v455 = vpop.permute.xlu0 %454
    %v456 = vmul.f32 %v453, %v78
    %v457 = vmul.f32 %v455, %v78
    %v458 = vadd.f32 %v420, %v438
    %v459 = vadd.f32 %v421, %v439
    %v460 = vadd.f32 %v458, %v444
    %v461 = vadd.f32 %v459, %v445
    %v462 = vadd.f32 %v460, %v450
    %v463 = vadd.f32 %v461, %v451
    %v464 = vadd.f32 %v462, %v456
    %v465 = vadd.f32 %v463, %v457
    %v466 = vmul.f32 %v464, 0.2
    %v467 = vmul.f32 %v465, 0.2
    %v468 = vsub.f32 %v466, 0.5
    %v469 = vsub.f32 %v467, 0.5
    %v470 = vmax.f32 %v468, 0.0
    %v471 = vmax.f32 %v469, 0.0
    %v472 = vadd.f32 %v470, %v471
    %473 = vadd.xlane.f32.xlu0 %v472
    %v474 = vpop.xlane.xlu0 %473
    %v475 = vrot.slane %v474, 4
    %v476 = vadd.f32 %v474, %v475
    %v477 = vrot.slane %v476, 2
    %v478 = vadd.f32 %v476, %v477
    %v479 = vrot.slane %v478, 1
    %v480 = vadd.f32 %v478, %v479
    %s481 = vtos %v480
    %s482 = smul.f32 %s481, 64.0
    %s483 = sadd.f32 %s433, %s482
    %v484 = vrot.slane %v470, 7
    %v485 = vrot.slane %v471, 7
    %v486 = vsel %vm85, %v484, %v485
    %v487 = vsel %vm85, %v485, %v484
    %v488 = vmul.f32 %v487, %v65
    %v489 = vmul.f32 %v486, %v66
    %v490 = vrot.slane %v470, 1
    %v491 = vrot.slane %v471, 1
    %v492 = vsel %vm92, %v490, %v491
    %v493 = vsel %vm92, %v491, %v490
    %v494 = vmul.f32 %v492, %v71
    %v495 = vmul.f32 %v493, %v72
    %496 = vrot.lane.b32.xlu0 %v470, 1
    %v497 = vpop.permute.xlu0 %496
    %498 = vrot.lane.b32.xlu0 %v471, 1
    %v499 = vpop.permute.xlu0 %498
    %v500 = vmul.f32 %v497, %v75
    %v501 = vmul.f32 %v499, %v75
    %502 = vrot.lane.b32.xlu0 %v470, 127
    %v503 = vpop.permute.xlu0 %502
    %504 = vrot.lane.b32.xlu0 %v471, 127
    %v505 = vpop.permute.xlu0 %504
    %v506 = vmul.f32 %v503, %v78
    %v507 = vmul.f32 %v505, %v78
    %v508 = vadd.f32 %v470, %v488
    %v509 = vadd.f32 %v471, %v489
    %v510 = vadd.f32 %v508, %v494
    %v511 = vadd.f32 %v509, %v495
    %v512 = vadd.f32 %v510, %v500
    %v513 = vadd.f32 %v511, %v501
    %v514 = vadd.f32 %v512, %v506
    %v515 = vadd.f32 %v513, %v507
    %v516 = vmul.f32 %v514, 0.2
    %v517 = vmul.f32 %v515, 0.2
    %v518 = vsub.f32 %v516, 0.5
    %v519 = vsub.f32 %v517, 0.5
    %v520 = vmax.f32 %v518, 0.0
    %v521 = vmax.f32 %v519, 0.0
    %v522 = vadd.f32 %v520, %v521
    %523 = vadd.xlane.f32.xlu0 %v522
    %v524 = vpop.xlane.xlu0 %523
    %v525 = vrot.slane %v524, 4
    %v526 = vadd.f32 %v524, %v525
    %v527 = vrot.slane %v526, 2
    %v528 = vadd.f32 %v526, %v527
    %v529 = vrot.slane %v528, 1
    %v530 = vadd.f32 %v528, %v529
    %s531 = vtos %v530
    %s532 = smul.f32 %s531, 81.0
    %s533 = sadd.f32 %s483, %s532
    %v534 = vrot.slane %v520, 7
    %v535 = vrot.slane %v521, 7
    %v536 = vsel %vm85, %v534, %v535
    %v537 = vsel %vm85, %v535, %v534
    %v538 = vmul.f32 %v537, %v65
    %v539 = vmul.f32 %v536, %v66
    %v540 = vrot.slane %v520, 1
    %v541 = vrot.slane %v521, 1
    %v542 = vsel %vm92, %v540, %v541
    %v543 = vsel %vm92, %v541, %v540
    %v544 = vmul.f32 %v542, %v71
    %v545 = vmul.f32 %v543, %v72
    %546 = vrot.lane.b32.xlu0 %v520, 1
    %v547 = vpop.permute.xlu0 %546
    %548 = vrot.lane.b32.xlu0 %v521, 1
    %v549 = vpop.permute.xlu0 %548
    %v550 = vmul.f32 %v547, %v75
    %v551 = vmul.f32 %v549, %v75
    %552 = vrot.lane.b32.xlu0 %v520, 127
    %v553 = vpop.permute.xlu0 %552
    %554 = vrot.lane.b32.xlu0 %v521, 127
    %v555 = vpop.permute.xlu0 %554
    %v556 = vmul.f32 %v553, %v78
    %v557 = vmul.f32 %v555, %v78
    %v558 = vadd.f32 %v520, %v538
    %v559 = vadd.f32 %v521, %v539
    %v560 = vadd.f32 %v558, %v544
    %v561 = vadd.f32 %v559, %v545
    %v562 = vadd.f32 %v560, %v550
    %v563 = vadd.f32 %v561, %v551
    %v564 = vadd.f32 %v562, %v556
    %v565 = vadd.f32 %v563, %v557
    %v566 = vmul.f32 %v564, 0.2
    %v567 = vmul.f32 %v565, 0.2
    %v568 = vsub.f32 %v566, 0.5
    %v569 = vsub.f32 %v567, 0.5
    %v570 = vmax.f32 %v568, 0.0
    %v571 = vmax.f32 %v569, 0.0
    %v572 = vadd.f32 %v570, %v571
    %573 = vadd.xlane.f32.xlu0 %v572
    %v574 = vpop.xlane.xlu0 %573
    %v575 = vrot.slane %v574, 4
    %v576 = vadd.f32 %v574, %v575
    %v577 = vrot.slane %v576, 2
    %v578 = vadd.f32 %v576, %v577
    %v579 = vrot.slane %v578, 1
    %v580 = vadd.f32 %v578, %v579
    %s581 = vtos %v580
    %s582 = smul.f32 %s581, 100.0
    %s583 = sadd.f32 %s533, %s582
    %v584 = vstv %s583
    %585 = vst [vmem:[#allocation7] sm:$0xff] %v584
    // Predicated region
    $region18: #{tpu_custom_call.1} parent=1 // pred_check
      _
    $region19: #{tpu_custom_call.1} parent=1 // pred_check_branch
      %587 = sbr.rel (0) target = $region21
    $region20: #{tpu_custom_call.1} parent=1 // pred_region
      %s589 = ssub.s32 128, 128
      %590 = vsyncadd [#allocation4], %s589
      %s592 = sshll.u32 [#allocation7], 4
      %s593 = int_to_ptr.vmem [resolvable:$true] %s592
      %595 = dma.vmem_to_hbm [thread:$0]  %s593, 128, %s2, [#allocation4]
    $region21: #{tpu_custom_call.1} parent=1 // pred_fallthru
      _
    // Predicated region
    $region22: #{tpu_custom_call.1} parent=1 // pred_check
      _
    $region23: #{tpu_custom_call.1} parent=1 // pred_check_branch
      %597 = sbr.rel (0) target = $region25
    $region24: #{tpu_custom_call.1} parent=1 // pred_region
      %598 = dma.done [#allocation4], 128
    $region25: #{tpu_custom_call.1} parent=1 // pred_fallthru
      _
    %599 = vsyncpa [#allocation3], 1
    %600 = vsyncpa [#allocation6], 1
    %601 = vsyncpa [#allocation4], 1

</llo_original>
